<compile_context>
chip_gen: v7x
topology: tpu7x:2x2x1
jax: 0.10.0
libtpu: 0.0.40
codegen_flags: <defaults>
</compile_context>

<pallas_src>
import jax
import jax.numpy as jnp
from jax.experimental import pallas as pl
from jax.experimental.pallas import tpu as pltpu

LANE = 128
_SUBLANE = {4: 8, 2: 16, 1: 32}   # min sublane multiple per element size


def _cdiv(a, b):
    return -(-a // b)


def _ceil_to(x, m):
    return _cdiv(x, m) * m


def _implicit_a_kernel(imp_ref, x_ref, o_ref):
    # imp_ref: (T_R, T_HW) pre-broadcast, or (T_R, 1) broadcast over lanes here.
    # x_ref / o_ref: (T_R, T_HW). Plain aligned VPU add; kernel is HBM-bound.
    o_ref[...] = x_ref[...] + imp_ref[...]


def implicit_a(x_nchw, implicit, *,
               block_bytes_target=1 << 20,         # ~1 MiB per x block per buffer
               vmem_limit_bytes=32 * 1024 * 1024,  # explicit budget (v7x: 64 MiB physical)
               alias_x=False):
    """x_nchw: (B, C, H, W); implicit: (1, C, 1, 1). Returns (B, C, H, W)."""
    B, C, H, W = x_nchw.shape
    HW = H * W
    dtype = x_nchw.dtype
    itemsize = jnp.dtype(dtype).itemsize
    sub = _SUBLANE.get(itemsize, 8)

    R = B * C
    elems_target = max(block_bytes_target // itemsize, sub * LANE)

    # ---- lane (spatial) tiling: multiple of 128, prefer 512-1024-wide tiles ----
    HW_pad = _ceil_to(HW, LANE)
    lanes_total = HW_pad // LANE
    cap = max(1, min(8, elems_target // (sub * LANE)))            # T_HW <= 1024
    t = max(d for d in range(1, min(cap, lanes_total) + 1) if lanes_total % d == 0)
    if t * LANE < 512 <= cap * LANE and lanes_total > cap:
        padded = _ceil_to(lanes_total, cap)
        if padded * 3 <= lanes_total * 4:                         # <=33% lane padding
            t, HW_pad = cap, padded * LANE
    T_HW = min(t * LANE, HW_pad)

    # ---- row (sublane) tiling: full extent if it fits, else multiples of `sub` ----
    rows_budget = max(sub, elems_target // T_HW)
    if R <= rows_budget:
        T_R, R_pad = R, R                  # full extent: no divisibility constraint
    else:
        n_row_tiles = _cdiv(R, (rows_budget // sub) * sub)
        T_R = _ceil_to(_cdiv(R, n_row_tiles), sub)
        R_pad = T_R * n_row_tiles

    # ---- build (padded) 2-D operands ----
    x2 = x_nchw.reshape(R, HW)
    if (R_pad, HW_pad) != (R, HW):
        x2 = jnp.pad(x2, ((0, R_pad - R), (0, HW_pad - HW)))

    # Per-row bias: row r = b*C + c  ->  implicit[c]. Cast explicitly to the
    # activation dtype (keeps the add a single-dtype VPU op, e.g. for bf16 x).
    bias_rows = jnp.broadcast_to(implicit.reshape(1, C).astype(dtype), (B, C)).reshape(R, 1)
    if R_pad != R:
        bias_rows = jnp.pad(bias_rows, ((0, R_pad - R), (0, 0)))

    if R_pad * T_HW * itemsize <= (2 << 20):
        # Cheap: pre-broadcast host-side to full block width so the in-kernel
        # add is shape-matched (no per-step lane broadcast).
        bias_arr = jnp.broadcast_to(bias_rows, (R_pad, T_HW))
        bias_spec = pl.BlockSpec((T_R, T_HW), lambda r, h: (r, 0))
    else:
        # Large B*C: keep the bias narrow and broadcast in-kernel; the
        # broadcast is fully hidden under DMA on this mem-bound kernel.
        bias_arr = bias_rows
        bias_spec = pl.BlockSpec((T_R, 1), lambda r, h: (r, 0))

    grid = (R_pad // T_R, HW_pad // T_HW)

    out = pl.pallas_call(
        _implicit_a_kernel,
        out_shape=jax.ShapeDtypeStruct((R_pad, HW_pad), dtype),
        grid=grid,
        in_specs=[
            bias_spec,                                        # bias: constant along HW axis
            pl.BlockSpec((T_R, T_HW), lambda r, h: (r, h)),   # x tile
        ],
        out_specs=pl.BlockSpec((T_R, T_HW), lambda r, h: (r, h)),
        compiler_params=pltpu.CompilerParams(
            dimension_semantics=("parallel", "parallel"),
            vmem_limit_bytes=vmem_limit_bytes,
        ),
        # Optionally donate x's buffer to the output (saves HBM footprint, not
        # bandwidth). Off by default: aliasing a non-donatable caller buffer
        # makes XLA insert a defensive copy.
        input_output_aliases=({1: 0} if alias_x else {}),
    )(bias_arr, x2)

    if (R_pad, HW_pad) != (R, HW):
        out = out[:R, :HW]
    return out.reshape(B, C, H, W)


if __name__ == "__main__":
    key = jax.random.PRNGKey(0)
    k_imp, k_x = jax.random.split(key)

    B, C, H, W = 2, 4, 16, 16
    # Parameter init mirrors nn.init.normal_(implicit, std=0.02) on zeros(1, C, 1, 1).
    implicit = 0.02 * jax.random.normal(k_imp, (1, C, 1, 1), dtype=jnp.float32)
    x = jax.random.normal(k_x, (B, C, H, W), dtype=jnp.float32)

    y = jax.block_until_ready(implicit_a(x, implicit))
    y_ref = x + implicit
    assert y.shape == x.shape
    assert jnp.allclose(y, y_ref, atol=1e-6), "mismatch vs reference (primary shape)"

    # Extra correctness check exercising the padding paths (C % 8 != 0, HW % 128 != 0).
    k2_imp, k2_x = jax.random.split(jax.random.PRNGKey(1))
    B2, C2, H2, W2 = 2, 3, 5, 7
    imp2 = 0.02 * jax.random.normal(k2_imp, (1, C2, 1, 1), dtype=jnp.float32)
    xb = jax.random.normal(k2_x, (B2, C2, H2, W2), dtype=jnp.float32)
    y2 = jax.block_until_ready(implicit_a(xb, imp2))
    assert jnp.allclose(y2, xb + imp2, atol=1e-6), "mismatch vs reference (padded shape)"

    print("KERNEL_OK")
</pallas_src>

<mosaic_0001>
module attributes {stable_mosaic.version = 11 : i64} {
  func.func @_implicit_a_kernel(%arg0: i32, %arg1: i32, %arg2: memref<8x256xf32, #tpu.memory_space<vmem>>, %arg3: memref<8x256xf32, #tpu.memory_space<vmem>>, %arg4: memref<8x256xf32, #tpu.memory_space<vmem>>) attributes {dimension_semantics = [#tpu.dimension_semantics<parallel>, #tpu.dimension_semantics<parallel>], iteration_bounds = array<i64: 1, 1>, scalar_prefetch = 0 : i64, scratch_operands = 0 : i64, tpu.core_type = #tpu.core_type<tc>, window_params = [{transform_indices = @transform_0, window_bounds = array<i64: 8, 256>}, {transform_indices = @transform_1, window_bounds = array<i64: 8, 256>}, {transform_indices = @transform_2, window_bounds = array<i64: 8, 256>}]} {
    %c0 = arith.constant 0 : index
    %c0_0 = arith.constant 0 : index
    %0 = vector.load %arg3[%c0, %c0_0] : memref<8x256xf32, #tpu.memory_space<vmem>>, vector<8x256xf32>
    %c0_1 = arith.constant 0 : index
    %c0_2 = arith.constant 0 : index
    %1 = vector.load %arg2[%c0_1, %c0_2] : memref<8x256xf32, #tpu.memory_space<vmem>>, vector<8x256xf32>
    %2 = arith.addf %0, %1 : vector<8x256xf32>
    %c0_3 = arith.constant 0 : index
    %c0_4 = arith.constant 0 : index
    %3 = vector.load %arg4[%c0_3, %c0_4] : memref<8x256xf32, #tpu.memory_space<vmem>>, vector<8x256xf32>
    tpu.vector_store %arg4[%c0_3, %c0_4], %2 {strides = array<i32>} : memref<8x256xf32, #tpu.memory_space<vmem>>, vector<8x256xf32>,
    return
  }
  func.func @transform_0(%arg0: i32, %arg1: i32) -> (i32, i32) {
    %c0_i32 = arith.constant 0 : i32
    %c0_i32_0 = arith.constant 0 : i32
    return %arg0, %c0_i32 : i32, i32
  }
  func.func @transform_1(%arg0: i32, %arg1: i32) -> (i32, i32) {
    %c0_i32 = arith.constant 0 : i32
    return %arg0, %arg1 : i32, i32
  }
  func.func @transform_2(%arg0: i32, %arg1: i32) -> (i32, i32) {
    %c0_i32 = arith.constant 0 : i32
    return %arg0, %arg1 : i32, i32
  }
}

</mosaic_0001>

<llo_original>
// kernel: tpu_custom_call.1
$region0: #{tpu_custom_call.1}
  #allocation0 [shape = 'u32[]', space=smem, size = 0x4, offset = 0x4, fixed_abs, tag = 'smem constant byte address 0x4 - core index']
  #allocation1 [shape = 'u32[144,128]{1,0:T(1,128)}', space=vmem, size = 0x12000, scoped, tag = 'internal scratch']
  %s0 = inlined_call_operand.hbm [shape: f32[8,256], index: 0, kind: input, shape index: {}]
  %s1 = inlined_call_operand.hbm [shape: f32[8,256], index: 1, kind: input, shape index: {}]
  %s2 = inlined_call_operand.hbm [shape: f32[8,256], index: 2, kind: output, shape index: {}]
  %s3 = sld [smem:[#allocation0]]
  $region26: #{tpu_custom_call.1} parent=0
    _
  %s5 = ssub.s32 1, %s3
  %s6 = scalar_select 0, %s5, %s3
  $region1: #{tpu_custom_call.1} parent=0
    #allocation2 [shape = 'u8[8192]{0}', space=vmem, size = 0x2000, scoped, tag = 'input window, operand 0, single buffered']
    #allocation3 [shape = 's32[1]{0}', space=sflag, size = 0x4, scoped, tag = 'scoped memory for tpu_custom_call.1']
    #allocation4 [shape = 's32[1]{0}', space=sflag, size = 0x4, scoped, tag = 'scoped memory for tpu_custom_call.1']
    #allocation5 [shape = 'u8[8192]{0}', space=vmem, size = 0x2000, scoped, tag = 'input window, operand 1, single buffered']
    #allocation6 [shape = 's32[1]{0}', space=sflag, size = 0x4, scoped, tag = 'scoped memory for tpu_custom_call.1']
    #allocation7 [shape = 'u8[8192]{0}', space=vmem, size = 0x2000, scoped, tag = 'output window, operand 0, single buffered']
    %7 = vsyncpa [#allocation3], 0
    %8 = vsyncpa [#allocation6], 0
    %9 = vsyncpa [#allocation4], 0
    // Predicated region
    $region2: #{tpu_custom_call.1} parent=1 // pred_check
      _
    $region3: #{tpu_custom_call.1} parent=1 // pred_check_branch
      %11 = sbr.rel (0) target = $region5
    $region4: #{tpu_custom_call.1} parent=1 // pred_region
      %s13 = ssub.s32 256, 256
      %14 = vsyncadd [#allocation3], %s13
      %s16 = sshll.u32 [#allocation2], 4
      %s17 = int_to_ptr.vmem [resolvable:$true] %s16
      %19 = dma.hbm_to_vmem [thread:$0]  %s0, 256, %s17, [#allocation3]
    $region5: #{tpu_custom_call.1} parent=1 // pred_fallthru
      _
    // Predicated region
    $region6: #{tpu_custom_call.1} parent=1 // pred_check
      _
    $region7: #{tpu_custom_call.1} parent=1 // pred_check_branch
      %21 = sbr.rel (0) target = $region9
    $region8: #{tpu_custom_call.1} parent=1 // pred_region
      %s23 = ssub.s32 256, 256
      %24 = vsyncadd [#allocation6], %s23
      %s26 = sshll.u32 [#allocation5], 4
      %s27 = int_to_ptr.vmem [resolvable:$true] %s26
      %29 = dma.hbm_to_vmem [thread:$0]  %s1, 256, %s27, [#allocation6]
    $region9: #{tpu_custom_call.1} parent=1 // pred_fallthru
      _
    // Predicated region
    $region10: #{tpu_custom_call.1} parent=1 // pred_check
      _
    $region11: #{tpu_custom_call.1} parent=1 // pred_check_branch
      %31 = sbr.rel (0) target = $region13
    $region12: #{tpu_custom_call.1} parent=1 // pred_region
      %32 = dma.done [#allocation3], 256
    $region13: #{tpu_custom_call.1} parent=1 // pred_fallthru
      _
    // Predicated region
    $region14: #{tpu_custom_call.1} parent=1 // pred_check
      _
    $region15: #{tpu_custom_call.1} parent=1 // pred_check_branch
      %34 = sbr.rel (0) target = $region17
    $region16: #{tpu_custom_call.1} parent=1 // pred_region
      %35 = dma.done [#allocation6], 256
    $region17: #{tpu_custom_call.1} parent=1 // pred_fallthru
      _
    %v36 = vld [vmem:[#allocation5] sm:$0xff]
    %v37 = vld [vmem:[#allocation5 + $0x8] sm:$0xff]
    %v38 = vld [vmem:[#allocation2] sm:$0xff]
    %v39 = vld [vmem:[#allocation2 + $0x8] sm:$0xff]
    %v40 = vadd.f32 %v36, %v38
    %v41 = vadd.f32 %v37, %v39
    %42 = vst [vmem:[#allocation7] sm:$0xff] %v40
    %43 = vst [vmem:[#allocation7 + $0x8] sm:$0xff] %v41
    // Predicated region
    $region18: #{tpu_custom_call.1} parent=1 // pred_check
      _
    $region19: #{tpu_custom_call.1} parent=1 // pred_check_branch
      %45 = sbr.rel (0) target = $region21
    $region20: #{tpu_custom_call.1} parent=1 // pred_region
      %s47 = ssub.s32 256, 256
      %48 = vsyncadd [#allocation4], %s47
      %s50 = sshll.u32 [#allocation7], 4
      %s51 = int_to_ptr.vmem [resolvable:$true] %s50
      %53 = dma.vmem_to_hbm [thread:$0]  %s51, 256, %s2, [#allocation4]
    $region21: #{tpu_custom_call.1} parent=1 // pred_fallthru
      _
    // Predicated region
    $region22: #{tpu_custom_call.1} parent=1 // pred_check
      _
    $region23: #{tpu_custom_call.1} parent=1 // pred_check_branch
      %55 = sbr.rel (0) target = $region25
    $region24: #{tpu_custom_call.1} parent=1 // pred_region
      %56 = dma.done [#allocation4], 256
    $region25: #{tpu_custom_call.1} parent=1 // pred_fallthru
      _
    %57 = vsyncpa [#allocation3], 1
    %58 = vsyncpa [#allocation6], 1
    %59 = vsyncpa [#allocation4], 1

</llo_original>
